<compile_context>
chip_gen: v7x
topology: tpu7x:2x2x1
jax: 0.10.0
libtpu: 0.0.40
codegen_flags: <defaults>
</compile_context>

<pallas_src>
import jax
import jax.numpy as jnp
from jax.experimental import pallas as pl
from jax.experimental.pallas import tpu as pltpu

NEG_SLOPE = 0.1            # LeakyReLU(0.1) in the reference (use_leaky=True)
CLAMP = (-200.0, 200.0)    # SceneFlowGRUResidual clamp


def _leaky(x):
    return jnp.where(x >= 0, x, NEG_SLOPE * x)


def _round_up(x, m):
    return ((x + m - 1) // m) * m


# -----------------------------------------------------------------------------
# Fused Pallas kernel:
#   GRUMappingNoGCN (radius=None, bn=False, 2-layer mlp, use_relu=False)
#   + SceneFlowGRUResidual residual fc + clamp.
# One grid step == one (batch, N-tile); all gate MLP matmuls, the neighbor max
# reduction, the GRU update and the flow head run inside the kernel.
# -----------------------------------------------------------------------------
def _gru_flow_kernel(
    x_ref,      # (1, NS, TN, CIN)  grouped [cost | direction_xyz]   (bf16)
    p1_ref,     # (1, TN, DLAT)     points1 (latent feats == up_feat) (f32)
    wg0_ref,    # (CIN, 3*C0)   [wr0 | wz0 | wh0]       (bf16)
    bg0_ref,    # (1, 3*C0)     [br0 | bz0 | bh0]       (f32)
    wfrz_ref,   # (DLAT, 2*C0)  [wfr | wfz]             (bf16)
    wr1_ref,    # (C0, C1)                              (bf16)
    br1_ref,    # (1, C1)                               (f32)
    wfro_ref,   # (DLAT, C0)                            (bf16)
    wzh1_ref,   # (2*C0, 2*C1)  block-diag(wz1, wh1)    (bf16)
    bzh1_ref,   # (1, 2*C1)     [bz1 | bh1]             (f32)
    wfc_ref,    # (C1, FLOW_W)  zero-padded cols 3..    (f32)
    bfc_ref,    # (1, FLOW_W)   zero-padded cols 3..    (f32)
    out_ref,    # (1, TN, DLAT + FLOW_W)  [feats_new | flow_local]  lane-dense (f32)
):
    f32 = jnp.float32
    bf16 = jnp.bfloat16
    _, ns, tn, cin = x_ref.shape
    dlat = p1_ref.shape[2]
    c0 = wg0_ref.shape[1] // 3
    c1 = wr1_ref.shape[1]

    p1 = p1_ref[0]                                           # [TN, DLAT] f32

    # fuse_r / fuse_z : one [TN, DLAT] @ [DLAT, 2*C0] matmul.
    frz = jnp.dot(p1.astype(bf16), wfrz_ref[...], preferred_element_type=f32)
    fr = frz[:, :c0]
    fz = frz[:, c0:]

    # Layer-0 of all three gate MLPs for ALL neighbors in a single MXU call:
    # [NS*TN, CIN] @ [CIN, 3*C0].
    xf = x_ref[0].reshape(ns * tn, cin)                      # bf16
    gate = jnp.dot(xf, wg0_ref[...], preferred_element_type=f32) + bg0_ref[...]
    gate = gate.reshape(ns, tn, 3 * c0)

    # ---- r branch: needs the full per-neighbor path (no max in reference). ----
    r0 = _leaky(gate[..., :c0] + fr[None])                   # [NS, TN, C0]
    r1 = jax.nn.sigmoid(
        jnp.dot(r0.reshape(ns * tn, c0).astype(bf16), wr1_ref[...],
                preferred_element_type=f32) + br1_ref[...]).reshape(ns, tn, c1)
    # fuse_r_o(r * points1), batched over neighbors (requires C1 == DLAT).
    rp = (r1 * p1[None]).reshape(ns * tn, dlat)
    pe = jnp.dot(rp.astype(bf16), wfro_ref[...],
                 preferred_element_type=f32).reshape(ns, tn, c0)

    # ---- z / h branches: LeakyReLU(0.1) is monotone, so the torch.max over the
    # nsample axis is taken BEFORE the activation (exact, 9x fewer VPU ops and no
    # [NS, TN, C0] activation intermediates). ----
    z0_max = _leaky(jnp.max(gate[..., c0:2 * c0], axis=0) + fz)   # [TN, C0]
    h0_max = _leaky(jnp.max(gate[..., 2 * c0:] + pe, axis=0))     # [TN, C0]

    # Second gate layers fused into one 128-lane matmul via block-diag(wz1, wh1).
    zh_in = jnp.concatenate([z0_max, h0_max], axis=-1).astype(bf16)   # [TN, 2*C0]
    zh = jnp.dot(zh_in, wzh1_ref[...], preferred_element_type=f32) + bzh1_ref[...]
    z = jax.nn.sigmoid(zh[:, :c1])
    h = jnp.tanh(zh[:, c1:])

    feats_new = (1.0 - z) * p1 + z * h                       # GRU update
    resid = feats_new - p1                                   # feats_new - feats

    # Residual flow head (fc + clamp) on lane-padded f32 weights.
    flow_local = jnp.clip(
        jnp.dot(resid, wfc_ref[...], preferred_element_type=f32) + bfc_ref[...],
        CLAMP[0], CLAMP[1])

    # Single lane-dense store (feat | padded flow_local). up_flow is added outside.
    out_ref[0] = jnp.concatenate([feats_new, flow_local], axis=-1).astype(out_ref.dtype)


_PACKED_ORDER = ("wg0", "bg0", "wfrz", "wr1", "br1", "wfro",
                 "wzh1", "bzh1", "wfc", "bfc")


def pack_gru_params(params):
    """Concatenate / pad / bf16-cast the raw GRUMappingNoGCN weights for the kernel."""
    f32, bf16 = jnp.float32, jnp.bfloat16
    c0 = params["wr0"].shape[1]
    c1 = params["wr1"].shape[1]
    dlat = params["wfr"].shape[0]
    out_w = _round_up(dlat + 3, 128)          # lane-dense combined output width
    flow_w = out_w - dlat

    wg0 = jnp.concatenate([params["wr0"], params["wz0"], params["wh0"]], axis=1)
    bg0 = jnp.concatenate([params["br0"], params["bz0"], params["bh0"]], axis=1)
    wfrz = jnp.concatenate([params["wfr"], params["wfz"]], axis=1)
    zero = jnp.zeros((c0, c1), f32)
    wzh1 = jnp.concatenate(
        [jnp.concatenate([params["wz1"], zero], axis=1),
         jnp.concatenate([zero, params["wh1"]], axis=1)], axis=0)      # [2C0, 2C1]
    bzh1 = jnp.concatenate([params["bz1"], params["bh1"]], axis=1)
    wfc = jnp.zeros((c1, flow_w), f32).at[:, :3].set(params["wfc"])
    bfc = jnp.zeros((1, flow_w), f32).at[:, :3].set(params["bfc"])
    return dict(
        wg0=wg0.astype(bf16), bg0=bg0.astype(f32),
        wfrz=wfrz.astype(bf16),
        wr1=params["wr1"].astype(bf16), br1=params["br1"].astype(f32),
        wfro=params["wfro"].astype(bf16),
        wzh1=wzh1.astype(bf16), bzh1=bzh1.astype(f32),
        wfc=wfc, bfc=bfc)


def _replicated_spec(shape):
    nd = len(shape)
    return pl.BlockSpec(shape, lambda b, n, _nd=nd: (0,) * _nd)


def scene_flow_gru_pallas(new_points, p1, up_flow, packed, *, tile_n=512):
    """new_points: [B, NS, N, CIN]; p1: [B, N, DLAT]; up_flow: [B, N, 3]."""
    B, NS, N, CIN = new_points.shape
    DLAT = p1.shape[-1]
    C0 = packed["wg0"].shape[1] // 3
    C1 = packed["wr1"].shape[1]
    assert DLAT == C1, "GRUMappingNoGCN needs latent_channel == mlp[-1]"
    flow_w = packed["wfc"].shape[1]
    out_w = DLAT + flow_w

    tn = N if N <= tile_n else tile_n         # tile over N; sized to fit VMEM
    # v7x has 2 TensorCores: make sure the "parallel" grid has >= 2 steps.
    if B * ((N + tn - 1) // tn) < 2 and N >= 16:
        tn = _round_up((N + 1) // 2, 8)
    grid = (B, pl.cdiv(N, tn))

    x = new_points.astype(jnp.bfloat16)
    p1 = p1.astype(jnp.float32)
    weights = [packed[k] for k in _PACKED_ORDER]

    in_specs = [
        pl.BlockSpec((1, NS, tn, CIN), lambda b, n: (b, 0, n, 0)),
        pl.BlockSpec((1, tn, DLAT), lambda b, n: (b, n, 0)),
    ] + [_replicated_spec(w.shape) for w in weights]
    out_spec = pl.BlockSpec((1, tn, out_w), lambda b, n: (b, n, 0))

    # Advisory cost estimate so XLA overlaps the surrounding gather/concat ops.
    flops = 2 * B * N * (NS * CIN * 3 * C0 + NS * C0 * C1 + NS * DLAT * C0
                         + DLAT * 2 * C0 + 2 * C0 * 2 * C1 + C1 * flow_w)
    transcendentals = B * N * (NS * C1 + 2 * C1)
    bytes_accessed = int(x.size) * 2 + int(p1.size) * 4 + B * N * out_w * 4 + \
        sum(int(w.size) * int(w.dtype.itemsize) for w in weights)

    out = pl.pallas_call(
        _gru_flow_kernel,
        grid=grid,
        in_specs=in_specs,
        out_specs=out_spec,
        out_shape=jax.ShapeDtypeStruct((B, N, out_w), jnp.float32),
        compiler_params=pltpu.CompilerParams(
            dimension_semantics=("parallel", "parallel"),   # B / N-tiles independent
            vmem_limit_bytes=48 * 1024 * 1024),             # <=48MiB: fits v7x 64MiB
        cost_estimate=pl.CostEstimate(
            flops=flops, transcendentals=transcendentals,
            bytes_accessed=bytes_accessed),
    )(x, p1, *weights)

    feats_new = out[..., :DLAT]
    # Reference: flow = clamp(fc(resid)) + up_flow  (clamp applies to flow_local only).
    flow = out[..., DLAT:DLAT + 3] + up_flow.astype(jnp.float32)
    return feats_new, flow


# -----------------------------------------------------------------------------
# Small generic 1x1-conv (+LeakyReLU) Pallas kernel, used for the stand-ins.
# Emits bf16 (all consumers are bf16) to halve the HBM writeback.
# -----------------------------------------------------------------------------
def _pw_conv_kernel(x_ref, w_ref, o_ref):
    y = jnp.dot(x_ref[0], w_ref[...], preferred_element_type=jnp.float32)
    o_ref[0] = _leaky(y).astype(o_ref.dtype)


def pointwise_conv_leaky(x, w, *, tile_n=512):
    """x: [B, N, Cin] channels-last; w: [Cin, Cout] -> bf16 [B, N, Cout]."""
    B, N, Cin = x.shape
    Cout = w.shape[1]
    tn = N if N <= tile_n else tile_n
    return pl.pallas_call(
        _pw_conv_kernel,
        grid=(B, pl.cdiv(N, tn)),
        in_specs=[pl.BlockSpec((1, tn, Cin), lambda b, n: (b, n, 0)),
                  pl.BlockSpec((Cin, Cout), lambda b, n: (0, 0))],
        out_specs=pl.BlockSpec((1, tn, Cout), lambda b, n: (b, n, 0)),
        out_shape=jax.ShapeDtypeStruct((B, N, Cout), jnp.bfloat16),
        compiler_params=pltpu.CompilerParams(
            dimension_semantics=("parallel", "parallel"),
            vmem_limit_bytes=32 * 1024 * 1024),
    )(x.astype(jnp.bfloat16), w.astype(jnp.bfloat16))


# -----------------------------------------------------------------------------
# JAX glue: KNN grouping (torch.topk / index_points_group). The gather / top-k
# stays in plain JAX; indices are transposed (tiny) so the grouped tensor is
# built DIRECTLY in the [B, ns, N, C] kernel layout — no transpose of the big
# 9x-duplicated array. Grouped features are emitted in bf16.
# TODO(synk): in-kernel gather via scalar-prefetched KNN indices would avoid
# materializing the 9x-duplicated grouped tensor in HBM entirely.
# -----------------------------------------------------------------------------
def knn_group(xyz, points2, nsample):
    """xyz: [B, N, 3], points2: [B, N, D2]  ->  [B, nsample, N, D2 + 3] (bf16)."""
    sq = jnp.sum(xyz * xyz, axis=-1)
    d = sq[:, :, None] + sq[:, None, :] - 2.0 * jnp.einsum('bnc,bmc->bnm', xyz, xyz)
    _, idx = jax.lax.top_k(-d, nsample)                 # [B, N, ns] smallest dists
    idx_t = jnp.transpose(idx, (0, 2, 1))               # [B, ns, N]  (tiny int32)
    gather = jax.vmap(lambda pts, ii: pts[ii])          # pts [N,C], ii [ns,N] -> [ns,N,C]
    neigh_xyz = gather(xyz, idx_t)                      # [B, ns, N, 3]
    grouped = gather(points2.astype(jnp.bfloat16), idx_t)   # [B, ns, N, D2] bf16
    direction = (neigh_xyz - xyz[:, None, :, :]).astype(jnp.bfloat16)
    return jnp.concatenate([grouped, direction], axis=-1)   # [B, ns, N, D2+3]


# -----------------------------------------------------------------------------
# Pure-JAX reference of the fused kernel (for a correctness spot-check only).
# -----------------------------------------------------------------------------
def scene_flow_gru_ref(new_points, p1, up_flow, params):
    P = jax.lax.Precision.HIGHEST
    mm = lambda a, b: jnp.matmul(a, b, precision=P)
    fr = mm(p1, params['wfr'])
    fz = mm(p1, params['wfz'])
    x = new_points                                                 # [B, NS, N, CIN]
    r0 = _leaky(mm(x, params['wr0']) + params['br0'] + fr[:, None])
    r1 = jax.nn.sigmoid(mm(r0, params['wr1']) + params['br1'])
    z0 = _leaky(mm(x, params['wz0']) + params['bz0'] + fz[:, None])
    z = jax.nn.sigmoid(mm(jnp.max(z0, axis=1), params['wz1']) + params['bz1'])
    pe = mm(r1 * p1[:, None], params['wfro'])
    h0 = _leaky(mm(x, params['wh0']) + params['bh0'] + pe)
    h = jnp.tanh(mm(jnp.max(h0, axis=1), params['wh1']) + params['bh1'])
    feats_new = (1.0 - z) * p1 + z * h
    flow_local = jnp.clip(mm(feats_new - p1, params['wfc']) + params['bfc'],
                          CLAMP[0], CLAMP[1])
    return feats_new, flow_local + up_flow


# -----------------------------------------------------------------------------
# Deterministic parameter init (shapes follow the nn.Module __init__).
# -----------------------------------------------------------------------------
def init_gru_flow_params(key, cin, dlat, c0, c1, scale=0.1):
    shapes = dict(
        wr0=(cin, c0), br0=(1, c0), wr1=(c0, c1), br1=(1, c1),
        wz0=(cin, c0), bz0=(1, c0), wz1=(c0, c1), bz1=(1, c1),
        wh0=(cin, c0), bh0=(1, c0), wh1=(c0, c1), bh1=(1, c1),
        wfr=(dlat, c0), wfz=(dlat, c0), wfro=(dlat, c0),
        wfc=(c1, 3), bfc=(1, 3),
    )
    keys = jax.random.split(key, len(shapes))
    return {name: scale * jax.random.normal(k, shp, jnp.float32)
            for (name, shp), k in zip(shapes.items(), keys)}


# -----------------------------------------------------------------------------
# RecurrentUnit wrapper (forward only).
# -----------------------------------------------------------------------------
class RecurrentUnitPallas:
    """Pallas port of RecurrentUnit.

    Exactly reproduced (hot path fused in one Pallas kernel per (batch, N-tile)):
      SceneFlowGRUResidual == GRUMappingNoGCN gate MLPs + neighbor max + GRU
      update + residual fc + clamp + flow accumulation.
    # TODO(synk): BidirectionalLayerFeatCosine / FlowEmbeddingLayer / PointWarping
    # have no definitions in the reference source; deterministic shape-preserving
    # stand-ins (fused 1x1 conv + leaky / identity) keep the recurrent loop runnable.
    """

    def __init__(self, iters, feat_ch, feat_new_ch, latent_ch, cross_mlp1,
                 cross_mlp2, flow_channels=(64, 64), flow_neighbors=9,
                 key=jax.random.PRNGKey(42)):
        assert latent_ch == flow_channels[-1], \
            "GRUMappingNoGCN needs latent_channel == mlp[-1] (r * points1 broadcast)"
        assert feat_new_ch == cross_mlp1[-1], \
            "loop consistency: cat([feat1, feat1_new]) must keep a fixed width"
        self.iters = iters
        self.nsample = flow_neighbors
        cost_ch = cross_mlp2[-1] + feat_ch                  # cost-volume channels fed to GRU
        k_gru, k_bid, k_fe = jax.random.split(key, 3)
        self.gru_params = init_gru_flow_params(
            k_gru, cost_ch + 3, latent_ch, flow_channels[0], flow_channels[1])
        self.gru_packed = pack_gru_params(self.gru_params)  # packed once, reused each iter
        self.bid_w = 0.1 * jax.random.normal(
            k_bid, (feat_ch + feat_new_ch, cross_mlp1[-1]), jnp.float32)
        self.fe_w = 0.1 * jax.random.normal(
            k_fe, (cross_mlp1[-1], cross_mlp2[-1]), jnp.float32)

    def __call__(self, pc1, pc2, feat1_new, feat2_new, feat1, feat2, up_flow, up_feat):
        t = lambda a: jnp.transpose(a, (0, 2, 1))           # [B,C,N] <-> [B,N,C]
        bf16 = jnp.bfloat16
        pc1_l = t(pc1).astype(jnp.float32)
        # Boundary feats kept bf16 through the loop (all consumers are bf16 MXU operands).
        f1, f2 = t(feat1).astype(bf16), t(feat2).astype(bf16)
        f1n, f2n = t(feat1_new).astype(bf16), t(feat2_new).astype(bf16)
        uflow = t(up_flow).astype(jnp.float32)
        ufeat = t(up_feat).astype(jnp.float32)               # GRU latent state stays f32
        B = f1.shape[0]

        c_feat1 = jnp.concatenate([f1, f1n], axis=-1)
        c_feat2 = jnp.concatenate([f2, f2n], axis=-1)

        flows = []
        feat_flow = ufeat
        for _ in range(self.iters):
            # TODO(synk): PointWarping undefined in reference -> pass-through stand-in.
            # TODO(synk): BidirectionalLayerFeatCosine stand-in (shared 1x1 conv + leaky);
            # both directions fused into one kernel launch (stacked along batch).
            both = pointwise_conv_leaky(
                jnp.concatenate([c_feat1, c_feat2], axis=0), self.bid_w)
            f1n, f2n = both[:B], both[B:]
            # TODO(synk): FlowEmbeddingLayer stand-in (1x1 conv + leaky).
            fe = pointwise_conv_leaky(f1n, self.fe_w)

            new_feat1 = jnp.concatenate([f1, fe], axis=-1)  # cost volume for the GRU flow head
            # SceneFlowGRUResidual (exact): KNN grouping glue + fused Pallas kernel.
            grouped = knn_group(pc1_l, new_feat1, self.nsample)
            feat_flow, flow = scene_flow_gru_pallas(grouped, ufeat, uflow, self.gru_packed)

            uflow, ufeat = flow, feat_flow
            c_feat1 = jnp.concatenate([f1, f1n], axis=-1)
            c_feat2 = jnp.concatenate([f2, f2n], axis=-1)
            flows.append(t(flow))

        return (flows, t(f1n).astype(jnp.float32), t(f2n).astype(jnp.float32),
                t(feat_flow))


if __name__ == "__main__":
    key = jax.random.PRNGKey(0)
    B, N = 2, 64
    feat_ch, feat_new_ch, latent_ch = 32, 32, 64
    cross_mlp1, cross_mlp2 = [32, 32], [32, 32]
    flow_channels = (64, 64)
    iters = 2

    ks = jax.random.split(key, 10)
    pc1 = jax.random.normal(ks[0], (B, 3, N), jnp.float32)
    pc2 = jax.random.normal(ks[1], (B, 3, N), jnp.float32)
    feat1 = jax.random.normal(ks[2], (B, feat_ch, N), jnp.float32)
    feat2 = jax.random.normal(ks[3], (B, feat_ch, N), jnp.float32)
    feat1_new = jax.random.normal(ks[4], (B, feat_new_ch, N), jnp.float32)
    feat2_new = jax.random.normal(ks[5], (B, feat_new_ch, N), jnp.float32)
    up_flow = 0.1 * jax.random.normal(ks[6], (B, 3, N), jnp.float32)
    up_feat = jax.random.normal(ks[7], (B, latent_ch, N), jnp.float32)

    model = RecurrentUnitPallas(iters, feat_ch, feat_new_ch, latent_ch,
                                cross_mlp1, cross_mlp2, flow_channels=flow_channels,
                                flow_neighbors=9, key=ks[8])

    flows, f1n_out, f2n_out, feat_flow_out = model(
        pc1, pc2, feat1_new, feat2_new, feat1, feat2, up_flow, up_feat)
    jax.block_until_ready((flows, f1n_out, f2n_out, feat_flow_out))

    # Correctness spot-check of the fused GRU/flow kernel vs pure-JAX f32 reference.
    # The kernel uses bf16 MXU operands with f32 accumulation -> ~1e-2 expected error.
    xyz = jnp.transpose(pc1, (0, 2, 1))
    cost = jax.random.normal(ks[9], (B, N, cross_mlp2[-1] + feat_ch), jnp.float32)
    grouped = knn_group(xyz, cost, model.nsample)
    ufeat_l = jnp.transpose(up_feat, (0, 2, 1))
    uflow_l = jnp.transpose(up_flow, (0, 2, 1))
    feat_r, flow_r = scene_flow_gru_ref(grouped.astype(jnp.float32), ufeat_l, uflow_l,
                                        model.gru_params)

    # (a) single full tile
    feat_k, flow_k = scene_flow_gru_pallas(grouped, ufeat_l, uflow_l, model.gru_packed)
    assert jnp.allclose(feat_k, feat_r, atol=5e-2, rtol=5e-2), \
        float(jnp.max(jnp.abs(feat_k - feat_r)))
    assert jnp.allclose(flow_k, flow_r, atol=5e-2, rtol=5e-2), \
        float(jnp.max(jnp.abs(flow_k - flow_r)))

    # (b) ragged N-tiling (N=64 with tile_n=48 -> tiles of 48 and a partial 16)
    feat_k2, flow_k2 = scene_flow_gru_pallas(grouped, ufeat_l, uflow_l,
                                             model.gru_packed, tile_n=48)
    assert jnp.allclose(feat_k2, feat_r, atol=5e-2, rtol=5e-2), \
        float(jnp.max(jnp.abs(feat_k2 - feat_r)))
    assert jnp.allclose(flow_k2, flow_r, atol=5e-2, rtol=5e-2), \
        float(jnp.max(jnp.abs(flow_k2 - flow_r)))

    print("KERNEL_OK")
</pallas_src>

<mosaic_0001>
module attributes {stable_mosaic.version = 11 : i64} {
  func.func @_pw_conv_kernel(%arg0: i32, %arg1: i32, %arg2: memref<1x64x64xbf16, #tpu.memory_space<vmem>>, %arg3: memref<64x32xbf16, #tpu.memory_space<vmem>>, %arg4: memref<1x64x32xbf16, #tpu.memory_space<vmem>>) attributes {dimension_semantics = [#tpu.dimension_semantics<parallel>, #tpu.dimension_semantics<parallel>], iteration_bounds = array<i64: 4, 1>, scalar_prefetch = 0 : i64, scratch_operands = 0 : i64, tpu.core_type = #tpu.core_type<tc>, window_params = [{transform_indices = @transform_0, window_bounds = array<i64: 1, 64, 64>}, {pipeline_mode = #tpu.pipeline_mode<synchronous>, transform_indices = @transform_1, window_bounds = array<i64: 64, 32>}, {transform_indices = @transform_2, window_bounds = array<i64: 1, 64, 32>}]} {
    %c0 = arith.constant 0 : index
    %c0_0 = arith.constant 0 : index
    %c0_1 = arith.constant 0 : index
    %0 = vector.load %arg2[%c0, %c0_0, %c0_1] : memref<1x64x64xbf16, #tpu.memory_space<vmem>>, vector<1x64x64xbf16>
    %1 = vector.shape_cast %0 : vector<1x64x64xbf16> to vector<64x64xbf16>
    %c0_2 = arith.constant 0 : index
    %c0_3 = arith.constant 0 : index
    %2 = vector.load %arg3[%c0_2, %c0_3] : memref<64x32xbf16, #tpu.memory_space<vmem>>, vector<64x32xbf16>
    %cst = arith.constant dense<0.000000e+00> : vector<64x32xf32>
    %3 = tpu.matmul %1, %2, %cst {dimension_numbers = #tpu.dot_dimension_numbers<[1], [0], [0], [1], [0, 0, 1, 1], [], []>} : vector<64x64xbf16>, vector<64x32xbf16>, vector<64x32xf32> -> vector<64x32xf32>
    %cst_4 = arith.constant 0.000000e+00 : f32
    %4 = vector.broadcast %cst_4 : f32 to vector<64x32xf32>
    %5 = arith.cmpf oge, %3, %4 : vector<64x32xf32>
    %cst_5 = arith.constant 1.000000e-01 : f32
    %6 = vector.broadcast %cst_5 : f32 to vector<64x32xf32>
    %7 = arith.mulf %6, %3 : vector<64x32xf32>
    %8 = arith.select %5, %3, %7 : vector<64x32xi1>, vector<64x32xf32>
    %9 = arith.truncf %8 : vector<64x32xf32> to vector<64x32xbf16>
    %c0_6 = arith.constant 0 : index
    %c0_7 = arith.constant 0 : index
    %c0_8 = arith.constant 0 : index
    %10 = vector.load %arg4[%c0_6, %c0_7, %c0_8] : memref<1x64x32xbf16, #tpu.memory_space<vmem>>, vector<1x64x32xbf16>
    %11 = vector.shape_cast %10 : vector<1x64x32xbf16> to vector<64x32xbf16>
    %12 = vector.shape_cast %9 : vector<64x32xbf16> to vector<1x64x32xbf16>
    tpu.vector_store %arg4[%c0_6, %c0_7, %c0_8], %12 {strides = array<i32>} : memref<1x64x32xbf16, #tpu.memory_space<vmem>>, vector<1x64x32xbf16>,
    return
  }
  func.func @transform_0(%arg0: i32, %arg1: i32) -> (i32, i32, i32) {
    %c0_i32 = arith.constant 0 : i32
    %c0_i32_0 = arith.constant 0 : i32
    return %arg0, %arg1, %c0_i32 : i32, i32, i32
  }
  func.func @transform_1(%arg0: i32, %arg1: i32) -> (i32, i32) {
    %c0_i32 = arith.constant 0 : i32
    %c0_i32_0 = arith.constant 0 : i32
    %c0_i32_1 = arith.constant 0 : i32
    return %c0_i32, %c0_i32_0 : i32, i32
  }
  func.func @transform_2(%arg0: i32, %arg1: i32) -> (i32, i32, i32) {
    %c0_i32 = arith.constant 0 : i32
    %c0_i32_0 = arith.constant 0 : i32
    return %arg0, %arg1, %c0_i32 : i32, i32, i32
  }
}

</mosaic_0001>

<llo_original>
// kernel: tpu_custom_call.1
$region0: #{tpu_custom_call.1}
  #allocation0 [shape = 'u32[]', space=smem, size = 0x4, offset = 0x4, fixed_abs, tag = 'smem constant byte address 0x4 - core index']
  #allocation1 [shape = 'u32[144,128]{1,0:T(1,128)}', space=vmem, size = 0x12000, scoped, tag = 'internal scratch']
  %s0 = inlined_call_operand.hbm [shape: bf16[4,64,64], index: 0, kind: input, shape index: {}]
  %s1 = inlined_call_operand.vmem [shape: bf16[64,32], index: 1, kind: input, shape index: {}]
  %s2 = inlined_call_operand.vmem [shape: bf16[4,64,32], index: 2, kind: output, shape index: {}]
  %s3 = sld [smem:[#allocation0]]
  $region45: #{tpu_custom_call.1} parent=0
    _
  %s5 = ssub.s32 1, %s3
  %s6 = scalar_select 0, %s5, %s3
  $region1: #{tpu_custom_call.1} parent=0
    #allocation2 [shape = 'u8[32768]{0}', space=vmem, size = 0x8000, scoped, tag = 'input window, operand 0']
    #allocation3 [shape = 's32[2]{0}', space=sflag, size = 0x8, scoped, tag = 'scoped memory for tpu_custom_call.1']
    %7 = vsyncpa [#allocation3], 0
    %s8 = scalar_lea.sflag [#allocation3], 1
    %9 = vsyncpa %s8, 0
    loop: start=0, step=1, limit=6
    $region2: #{tpu_custom_call.1} parent=1 // loop_pre_header
      _
    $region3: #{tpu_custom_call.1} parent=1 // loop_header
      %s11 = sphi 0, %s15
      %p12 = scmp.ge.s32.totalorder %s11, 6
      %s18 = sphi 0, %s30
      %s19 = sphi 0, %s26
      %s20 = sphi 0, %s18
      %s21 = sphi 0, %s19
      %s22 = sphi 0, %s20
      %s23 = sphi 0, %s21
      %s35 = sphi 0, %s37
      %s38 = sphi 0, %s35
      %s39 = sphi 0, %s38
      %s55 = sphi 0, %s39
      %s59 = sphi 0, %s59
      %s61 = sphi 0, %s59
      %s62 = sphi 0, %s61
      %s76 = sphi 0, %s62
      %s84 = sphi 0, %s86
      %s87 = sphi 0, %s84
      %s88 = sphi 0, %s87
      %s104 = sphi 0, %s88
    $region4: #{tpu_custom_call.1} parent=1 // loop_header_branch
      %14 = sbr.rel (%p12) target = $region8
    $region5: #{tpu_custom_call.1} parent=1 // loop_body
      %s16 = ssub.s32 %s11, 1
      %s17 = ssub.s32 %s11, 2
      %s24 = sadd.s32 1, %s19
      %p25 = scmp.ge.s32.totalorder %s24, 1
      %s26 = scalar_select %p25, 0, %s24
      %s27 = sadd.s32 1, %s18
      %s28 = scalar_select %p25, %s27, %s18
      %p29 = scmp.ge.s32.totalorder %s28, 4
      %s30 = scalar_select %p29, 0, %s28
      %s31 = ssub.s32 %s18, %s30
      %s32 = ssub.s32 %s19, %s26
      %s33 = sor.u32 %s31, %s32
      %p34 = scmp.eq.s32.totalorder %s33, 0
      %s36 = sadd.s32 %s35, 1
      %s37 = scalar_select %p34, %s35, %s36
      %p40 = pneg %p34
      %p41 = scmp.eq.s32.totalorder %s11, 3
      %p42 = por %p40, %p41
      %p43 = scmp.ne.s32.totalorder %s35, %s38
      %p44 = scmp.eq.s32.totalorder %s11, 0
      %p45 = por %p43, %p44
      %p46 = scmp.ne.s32.totalorder %s35, %s38
      %p47 = scmp.eq.s32.totalorder %s16, 3
      %p48 = por %p46, %p47
      %p49 = scmp.ne.s32.totalorder %s38, %s39
      %p50 = scmp.eq.s32.totalorder %s16, 0
      %p51 = por %p49, %p50
      %p52 = scmp.ne.s32.totalorder %s38, %s39
      %p53 = scmp.eq.s32.totalorder %s17, 3
      %p54 = por %p52, %p53
      %p56 = scmp.ne.s32.totalorder %s39, %s55
      %p57 = scmp.eq.s32.totalorder %s17, 0
      %p58 = por %p56, %p57
      %s60 = sadd.s32 %s59, 1
      %p63 = scmp.eq.s32.totalorder %s11, 3
      %p64 = scmp.ne.s32.totalorder %s59, %s61
      %p65 = scmp.eq.s32.totalorder %s11, 0
      %p66 = por %p64, %p65
      %p67 = scmp.ne.s32.totalorder %s59, %s61
      %p68 = scmp.eq.s32.totalorder %s16, 3
      %p69 = por %p67, %p68
      %p70 = scmp.ne.s32.totalorder %s61, %s62
      %p71 = scmp.eq.s32.totalorder %s16, 0
      %p72 = por %p70, %p71
      %p73 = scmp.ne.s32.totalorder %s61, %s62
      %p74 = scmp.eq.s32.totalorder %s17, 3
      %p75 = por %p73, %p74
      %p77 = scmp.ne.s32.totalorder %s62, %s76
      %p78 = scmp.eq.s32.totalorder %s17, 0
      %p79 = por %p77, %p78
      %s80 = ssub.s32 %s18, %s30
      %s81 = ssub.s32 %s19, %s26
      %s82 = sor.u32 %s80, %s81
      %p83 = scmp.eq.s32.totalorder %s82, 0
      %s85 = sadd.s32 %s84, 1
      %s86 = scalar_select %p83, %s84, %s85
      %p89 = pneg %p83
      %p90 = scmp.eq.s32.totalorder %s11, 3
      %p91 = por %p89, %p90
      %p92 = scmp.ne.s32.totalorder %s84, %s87
      %p93 = scmp.eq.s32.totalorder %s11, 0
      %p94 = por %p92, %p93
      %p95 = scmp.ne.s32.totalorder %s84, %s87
      %p96 = scmp.eq.s32.totalorder %s16, 3
      %p97 = por %p95, %p96
      %p98 = scmp.ne.s32.totalorder %s87, %s88
      %p99 = scmp.eq.s32.totalorder %s16, 0
      %p100 = por %p98, %p99
      %p101 = scmp.ne.s32.totalorder %s87, %s88
      %p102 = scmp.eq.s32.totalorder %s17, 3
      %p103 = por %p101, %p102
      %p105 = scmp.ne.s32.totalorder %s88, %s104
      %p106 = scmp.eq.s32.totalorder %s17, 0
      %p107 = por %p105, %p106
      %p108 = scmp.le.s32.totalorder 1, %s11
      %p109 = scmp.lt.s32.totalorder %s11, 5
      %p110 = pnand %p108, %p109
      %p111 = pneg %p110
      // Predicated region
      $region9: #{tpu_custom_call.1} parent=5 // pred_check
        _
      $region10: #{tpu_custom_call.1} parent=5 // pred_check_branch
        %113 = sbr.rel (%p110) target = $region12
      $region11: #{tpu_custom_call.1} parent=5 // pred_region
        %s114 = ssub.s32 %s11, 1
        // Predicated region
        $region13: #{tpu_custom_call.1} parent=11 // pred_check
          %p115 = pneg %p72
        $region14: #{tpu_custom_call.1} parent=11 // pred_check_branch
          %117 = sbr.rel (%p115) target = $region16
        $region15: #{tpu_custom_call.1} parent=11 // pred_region
          _
        $region16: #{tpu_custom_call.1} parent=11 // pred_fallthru
          _
      $region12: #{tpu_custom_call.1} parent=5 // pred_fallthru
        _
      %p118 = scmp.lt.s32.totalorder %s11, 4
      // Predicated region
      $region17: #{tpu_custom_call.1} parent=5 // pred_check
        %p119 = pneg %p118
      $region18: #{tpu_custom_call.1} parent=5 // pred_check_branch
        %121 = sbr.rel (%p119) target = $region20
      $region19: #{tpu_custom_call.1} parent=5 // pred_region
        // Predicated region
        $region21: #{tpu_custom_call.1} parent=19 // pred_check
          %p122 = pneg %p45
        $region22: #{tpu_custom_call.1} parent=19 // pred_check_branch
          %124 = sbr.rel (%p122) target = $region24
        $region23: #{tpu_custom_call.1} parent=19 // pred_region
          %s125 = sand.u32 %s35, 1
          %s126 = scalar_lea.sflag [#allocation3], %s125
          %s127 = sand.u32 %s35, 1
          %s128 = smul.addr %s127, 32
          %s129 = scalar_lea.vmem [#allocation2], %s128
          %s130 = smul.u32 8, %s19
          %s132 = ssub.s32 512, 512
          %133 = vsyncadd %s126, %s132
          %s134 = smul.addr %s18, 8
          %s135 = sadd.s32 %s130, %s134
          %s136 = smul.addr %s135, 64
          %s137 = scalar_lea.hbm %s0, %s136
          %s138 = sshll.u32 %s129, 4
          %s139 = int_to_ptr.vmem [resolvable:$true] %s138
          %144 = dma.hbm_to_vmem [thread:$0]  %s137, 512, %s139, %s126, 64, 64, 4
        $region24: #{tpu_custom_call.1} parent=19 // pred_fallthru
          _
      $region20: #{tpu_custom_call.1} parent=5 // pred_fallthru
        _
      %p145 = scmp.le.s32.totalorder 1, %s11
      %p146 = scmp.lt.s32.totalorder %s11, 5
      %p147 = pnand %p145, %p146
      %p148 = pneg %p147
      // Predicated region
      $region25: #{tpu_custom_call.1} parent=5 // pred_check
        _
      $region26: #{tpu_custom_call.1} parent=5 // pred_check_branch
        %150 = sbr.rel (%p147) target = $region28
      $region27: #{tpu_custom_call.1} parent=5 // pred_region
        %s151 = ssub.s32 %s11, 1
        %s152 = sand.u32 %s38, 1
        %s153 = scalar_lea.sflag [#allocation3], %s152
        %s154 = sand.u32 %s38, 1
        %s155 = smul.addr %s154, 32
        %s156 = scalar_lea.vmem [#allocation2], %s155
        // Predicated region
        $region29: #{tpu_custom_call.1} parent=27 // pred_check
          %p157 = pneg %p51
        $region30: #{tpu_custom_call.1} parent=27 // pred_check_branch
          %159 = sbr.rel (%p157) target = $region32
        $region31: #{tpu_custom_call.1} parent=27 // pred_region
          %160 = dma.done %s153, 512
        $region32: #{tpu_custom_call.1} parent=27 // pred_fallthru
          _
        %s161 = sand.u32 %s38, 1
        %s162 = scalar_lea.sflag [#allocation3], %s161
        %s163 = sand.u32 %s38, 1
        %s164 = smul.addr %s163, 32
        %s165 = scalar_lea.vmem [#allocation2], %s164
        %p166 = pneg %p51
        %p167 = pneg %p48
        %p168 = pneg %p72
        %p169 = pneg %p69
        %p170 = pneg %p100
        %p171 = pneg %p97
        %s172 = smul.u32 8, %s21
        %p173 = scmp.lt.s32.totalorder %s20, 3
        %s174 = scalar_select %p173, %s20, 3
        %p175 = scmp.lt.s32.totalorder %s172, 7
        %s176 = scalar_select %p175, %s172, 7
        %s177 = smul.addr %s174, 8
        %s178 = sadd.s32 %s176, %s177
        %s179 = smul.addr %s178, 4
        %s180 = scalar_lea.vmem %s2, %s179
        %s181 = smul.u32 8, %s21
        %s182 = smul.u32 8, %s21
        %p183 = scmp.lt.s32.totalorder %s20, 3
        %s184 = scalar_select %p183, %s20, 3
        %p185 = scmp.lt.s32.totalorder %s182, 7
        %s186 = scalar_select %p185, %s182, 7
        %s187 = smul.addr %s184, 8
        %s188 = sadd.s32 %s186, %s187
        %s189 = smul.addr %s188, 4
        %s190 = scalar_lea.vmem %s2, %s189
        %s191 = smul.u32 8, %s21
        %v193 = vld [vmem:[%s156] sm:$0xf]
        %v194 = vld [vmem:[%s156 + $0x4] sm:$0xf]
        %v195 = vld [vmem:[%s156 + $0x8] sm:$0xf]
        %v196 = vld [vmem:[%s156 + $0xc] sm:$0xf]
        %v197 = vld [vmem:[%s156 + $0x10] sm:$0xf]
        %v198 = vld [vmem:[%s156 + $0x14] sm:$0xf]
        %v199 = vld [vmem:[%s156 + $0x18] sm:$0xf]
        %v200 = vld [vmem:[%s156 + $0x1c] sm:$0xf]
        %v201 = vld [vmem:[%s1] sm:$0xf]
        %v202 = vld [vmem:[%s1 + $0x4] sm:$0xf]
        %v203 = vld [vmem:[%s1 + $0x8] sm:$0xf]
        %v204 = vld [vmem:[%s1 + $0xc] sm:$0xf]
        %v205 = vld [vmem:[%s1 + $0x10] sm:$0xf]
        %v206 = vld [vmem:[%s1 + $0x14] sm:$0xf]
        %v207 = vld [vmem:[%s1 + $0x18] sm:$0xf]
        %v208 = vld [vmem:[%s1 + $0x1c] sm:$0xf]
        %v217 = vunpack.c.l.b16 %v193
        %v218 = vunpack.c.l.b16 %v194
        %v219 = vunpack.c.l.b16 %v195
        %v220 = vunpack.c.l.b16 %v196
        %v221 = vunpack.c.l.b16 %v197
        %v222 = vunpack.c.l.b16 %v198
        %v223 = vunpack.c.l.b16 %v199
        %v224 = vunpack.c.l.b16 %v200
        %v225 = vpack.c.b16 %v218, %v217
        %v226 = vpack.c.b16 %v220, %v219
        %v227 = vpack.c.b16 %v222, %v221
        %v228 = vpack.c.b16 %v224, %v223
        %v237 = vunpack.c.l.b16 %v201
        %v238 = vunpack.c.l.b16 %v202
        %v239 = vunpack.c.l.b16 %v203
        %v240 = vunpack.c.l.b16 %v204
        %v241 = vunpack.c.l.b16 %v205
        %v242 = vunpack.c.l.b16 %v206
        %v243 = vunpack.c.l.b16 %v207
        %v244 = vunpack.c.l.b16 %v208
        %v245 = vpack.c.b16 %v238, %v237
        %v246 = vpack.c.b16 %v240, %v239
        %v247 = vpack.c.b16 %v242, %v241
        %v248 = vpack.c.b16 %v244, %v243
        %vm253 = vcmask 523264
        %v255 = vsel %vm253, %v225, 0
        %v258 = vsel %vm253, %v226, 0
        %v261 = vsel %vm253, %v227, 0
        %v264 = vsel %vm253, %v228, 0
        %266 = vmatprep.subr.bf16.mxu0 0
        %267 = vmatpush1.bf16.msra.mxu0 %v245
        %268 = vmatprep.subr.bf16.mxu0 0
        %269 = vmatpush1.bf16.msra.mxu0 %v246
        %270 = vmatprep.subr.bf16.mxu0 0
        %271 = vmatpush1.bf16.msra.mxu0 %v247
        %272 = vmatprep.subr.bf16.mxu0 0
        %273 = vmatpush1.bf16.msra.mxu0 %v248
        %274 = vmatprep.subr.bf16.mxu0 0
        %275 = vmatpush1.bf16.msra.mxu0 0
        %276 = vmatprep.subr.bf16.mxu0 0
        %277 = vmatpush1.bf16.msra.mxu0 0
        %278 = vmatprep.subr.bf16.mxu0 0
        %279 = vmatpush1.bf16.msra.mxu0 0
        %280 = vmatprep.subr.bf16.mxu0 0
        %281 = vmatpush1.bf16.msra.mxu0 0
        %282 = vmatprep.subr.bf16.mxu0 0
        %283 = vmatpush1.bf16.msra.mxu0 0
        %284 = vmatprep.subr.bf16.mxu0 0
        %285 = vmatpush1.bf16.msra.mxu0 0
        %286 = vmatprep.subr.bf16.mxu0 0
        %287 = vmatpush1.bf16.msra.mxu0 0
        %288 = vmatprep.subr.bf16.mxu0 0
        %289 = vmatpush1.bf16.msra.mxu0 0
        %290 = vmatprep.subr.bf16.mxu0 0
        %291 = vmatpush1.bf16.msra.mxu0 0
        %292 = vmatprep.subr.bf16.mxu0 0
        %293 = vmatpush1.bf16.msra.mxu0 0
        %294 = vmatprep.subr.bf16.mxu0 0
        %295 = vmatpush1.bf16.msra.mxu0 0
        %296 = vmatprep.subr.bf16.mxu0 0
        %297 = vmatpush1.bf16.msra.mxu0 0
        %298 = vmatprep.mubr.bf16.mxu0 0
        %299 = vmatmul.mubr.bf16.gmra.mrb[0].mxu0 %v255
        %v300 = vpop.f32.mrb[0].mxu0
        %v301 = vadd.f32 0.0, %v300
        %v302 = vpop.f32.mrb[0].mxu0
        %v303 = vpop.f32.mrb[0].mxu0
        %v304 = vadd.f32 0.0, %v303
        %v305 = vpop.f32.mrb[0].mxu0
        %306 = vmatprep.mubr.bf16.mxu0 0
        %307 = vmatmul.mubr.bf16.gmra.mrb[0].mxu0 %v258
        %v308 = vpop.f32.mrb[0].mxu0
        %v309 = vadd.f32 0.0, %v308
        %v310 = vpop.f32.mrb[0].mxu0
        %v311 = vpop.f32.mrb[0].mxu0
        %v312 = vadd.f32 0.0, %v311
        %v313 = vpop.f32.mrb[0].mxu0
        %314 = vmatprep.mubr.bf16.mxu0 0
        %315 = vmatmul.mubr.bf16.gmra.mrb[0].mxu0 %v261
        %v316 = vpop.f32.mrb[0].mxu0
        %v317 = vadd.f32 0.0, %v316
        %v318 = vpop.f32.mrb[0].mxu0
        %v319 = vpop.f32.mrb[0].mxu0
        %v320 = vadd.f32 0.0, %v319
        %v321 = vpop.f32.mrb[0].mxu0
        %322 = vmatprep.mubr.bf16.mxu0 0
        %323 = vmatmul.mubr.bf16.gmra.mrb[0].mxu0 %v264
        %v324 = vpop.f32.mrb[0].mxu0
        %v325 = vadd.f32 0.0, %v324
        %v326 = vpop.f32.mrb[0].mxu0
        %v327 = vpop.f32.mrb[0].mxu0
        %v328 = vadd.f32 0.0, %v327
        %v329 = vpop.f32.mrb[0].mxu0
        %330 = vdwg.mxu0
        %vm331 = vcmp.ge.f32.partialorder %v301, 0.0
        %vm332 = vcmp.ge.f32.partialorder %v304, 0.0
        %vm333 = vcmp.ge.f32.partialorder %v309, 0.0
        %vm334 = vcmp.ge.f32.partialorder %v312, 0.0
        %vm335 = vcmp.ge.f32.partialorder %v317, 0.0
        %vm336 = vcmp.ge.f32.partialorder %v320, 0.0
        %vm337 = vcmp.ge.f32.partialorder %v325, 0.0
        %vm338 = vcmp.ge.f32.partialorder %v328, 0.0
        %v339 = vmul.f32 %v301, 0.1
        %v340 = vmul.f32 %v304, 0.1
        %v341 = vmul.f32 %v309, 0.1
        %v342 = vmul.f32 %v312, 0.1
        %v343 = vmul.f32 %v317, 0.1
        %v344 = vmul.f32 %v320, 0.1
        %v345 = vmul.f32 %v325, 0.1
        %v346 = vmul.f32 %v328, 0.1
        %v347 = vsel %vm331, %v301, %v339
        %v348 = vsel %vm332, %v304, %v340
        %v349 = vsel %vm333, %v309, %v341
        %v350 = vsel %vm334, %v312, %v342
        %v351 = vsel %vm335, %v317, %v343
        %v352 = vsel %vm336, %v320, %v344
        %v353 = vsel %vm337, %v325, %v345
        %v354 = vsel %vm338, %v328, %v346
        %v355 = vpack.c.bf16 %v348, %v347
        %v356 = vpack.c.bf16 %v350, %v349
        %v357 = vpack.c.bf16 %v352, %v351
        %v358 = vpack.c.bf16 %v354, %v353
        %v363 = vunpack.c.l.b16 %v355
        %v364 = vunpack.c.h.b16 %v355
        %v365 = vunpack.c.l.b16 %v356
        %v366 = vunpack.c.h.b16 %v356
        %v367 = vunpack.c.l.b16 %v357
        %v368 = vunpack.c.h.b16 %v357
        %v369 = vunpack.c.l.b16 %v358
        %v370 = vunpack.c.h.b16 %v358
        %v371 = vpack.c.b16 %v363, %v363
        %v372 = vpack.c.b16 %v364, %v364
        %v373 = vpack.c.b16 %v365, %v365
        %v374 = vpack.c.b16 %v366, %v366
        %v375 = vpack.c.b16 %v367, %v367
        %v376 = vpack.c.b16 %v368, %v368
        %v377 = vpack.c.b16 %v369, %v369
        %v378 = vpack.c.b16 %v370, %v370
        %vm387 = vcmask 257024
        %388 = vst.msk [vmem:[%s190] sm:$0xf] %vm387, %v371
        %389 = vst.msk [vmem:[%s190 + $0x4] sm:$0xf] %vm387, %v372
        %390 = vst.msk [vmem:[%s190 + $0x8] sm:$0xf] %vm387, %v373
        %391 = vst.msk [vmem:[%s190 + $0xc] sm:$0xf] %vm387, %v374
        %392 = vst.msk [vmem:[%s190 + $0x10] sm:$0xf] %vm387, %v375
        %393 = vst.msk [vmem:[%s190 + $0x14] sm:$0xf] %vm387, %v376
        %394 = vst.msk [vmem:[%s190 + $0x18] sm:$0xf] %vm387, %v377
        %395 = vst.msk [vmem:[%s190 + $0x1c] sm:$0xf] %vm387, %v378
        %s396 = smul.u32 8, %s21
        %p397 = scmp.lt.s32.totalorder %s20, 3
        %s398 = scalar_select %p397, %s20, 3
        %p399 = scmp.lt.s32.totalorder %s396, 7
        %s400 = scalar_select %p399, %s396, 7
        %s401 = smul.addr %s398, 8
        %s402 = sadd.s32 %s400, %s401
        %s403 = smul.addr %s402, 4
        %s404 = scalar_lea.vmem %s2, %s403
        // Predicated region
        $region33: #{tpu_custom_call.1} parent=27 // pred_check
          %p405 = pneg %p97
        $region34: #{tpu_custom_call.1} parent=27 // pred_check_branch
          %407 = sbr.rel (%p405) target = $region36
        $region35: #{tpu_custom_call.1} parent=27 // pred_region
          %s408 = smul.u32 8, %s21
        $region36: #{tpu_custom_call.1} parent=27 // pred_fallthru
          _
      $region28: #{tpu_custom_call.1} parent=5 // pred_fallthru
        _
      %p409 = scmp.le.s32.totalorder 2, %s11
      // Predicated region
      $region37: #{tpu_custom_call.1} parent=5 // pred_check
        %p410 = pneg %p409
      $region38: #{tpu_custom_call.1} parent=5 // pred_check_branch
        %412 = sbr.rel (%p410) target = $region40
      $region39: #{tpu_custom_call.1} parent=5 // pred_region
        %s413 = ssub.s32 %s11, 2
        // Predicated region
        $region41: #{tpu_custom_call.1} parent=39 // pred_check
          %p414 = pneg %p103
        $region42: #{tpu_custom_call.1} parent=39 // pred_check_branch
          %416 = sbr.rel (%p414) target = $region44
        $region43: #{tpu_custom_call.1} parent=39 // pred_region
          %s417 = smul.u32 8, %s23
          %p418 = scmp.lt.s32.totalorder %s22, 3
          %s419 = scalar_select %p418, %s22, 3
          %p420 = scmp.lt.s32.totalorder %s417, 7
          %s421 = scalar_select %p420, %s417, 7
          %s422 = smul.addr %s419, 8
          %s423 = sadd.s32 %s421, %s422
          %s424 = smul.addr %s423, 4
          %s425 = scalar_lea.vmem %s2, %s424
        $region44: #{tpu_custom_call.1} parent=39 // pred_fallthru
          _
      $region40: #{tpu_custom_call.1} parent=5 // pred_fallthru
        _
    $region6: #{tpu_custom_call.1} parent=1 // loop_footer
      %s15 = sadd.s32 1, %s11
    $region7: #{tpu_custom_call.1} parent=1 // loop_footer_branch
      %10 = sbr.rel target = $region3
    $region8: #{tpu_custom_call.1} parent=1 // loop_exit
      _
    %426 = vsyncpa [#allocation3], 1
    %s427 = scalar_lea.sflag [#allocation3], 1
    %428 = vsyncpa %s427, 1

</llo_original>
